<compile_context>
chip_gen: v5e
topology: v5e:2x2
jax: 0.10.0
libtpu: 0.0.40
codegen_flags: <defaults>
</compile_context>

<pallas_src>
import functools

import jax
import jax.numpy as jnp
from jax import lax
from jax.experimental import pallas as pl
from jax.experimental.pallas import tpu as pltpu

INPUT_DIM = 4
H1 = 64
H2 = 32
OUT = 1
OUT_PAD = 8      # layer-3 weight rows padded to a sublane multiple

TB_MAX = 8192    # max batch-tile (lanes per grid step); ~14 MiB VMEM worst case


def _mlp_kernel(x_ref, w1_ref, b1_ref, w2_ref, b2_ref, w3p_ref, b3_ref, o_ref):
    # x_ref: (TB, 4) f32 -- natural batch-major layout straight from HBM.
    x = x_ref[...]                                            # (TB, 4) f32

    # ---- Layer 1 (4 -> 64) on the MXU.  Contract the size-4 feature dim of
    # both operands (rhs-transposed dot); result is (64, TB): batch on lanes.
    # f32 operands: K=4 is tiny and the MXU has plenty of slack.
    h1 = lax.dot_general(
        w1_ref[...], x,
        dimension_numbers=(((1,), (1,)), ((), ())),
        preferred_element_type=jnp.float32,
    )                                                         # (64, TB) f32
    h1 = jnp.maximum(h1 + b1_ref[...], 0.0)                   # bias + ReLU (VPU)

    # ---- Layer 2 (64 -> 32) on the MXU: bf16 operands, f32 accumulation.
    h2 = jnp.dot(w2_ref[...], h1.astype(jnp.bfloat16),
                 preferred_element_type=jnp.float32)          # (32, TB) f32
    h2 = jnp.maximum(h2 + b2_ref[...], 0.0)

    # ---- Layer 3 (32 -> 1) on the MXU.  w3 is zero-padded to 8 output rows
    # in the wrapper; row 0 carries the real output.
    y8 = jnp.dot(w3p_ref[...], h2, preferred_element_type=jnp.float32)  # (8, TB)
    o_ref[...] = (y8[0:1, :] + b3_ref[...]).astype(o_ref.dtype)         # (1, TB) lane-dense


def _choose_tiling(B):
    """Pick (tile, padded batch, grid steps).

    * tile is a multiple of 128 (lane-dense output stores),
    * >= 2 grid steps when the batch allows it (v7x: 2 TensorCores),
    * padding waste stays at ~<= a few percent of the batch.
    """
    B128 = pl.cdiv(B, 128) * 128
    if B128 < 256:
        return B128, B128, 1
    nsteps = max(2, pl.cdiv(B128, TB_MAX))
    tb = pl.cdiv(B128, nsteps * 128) * 128
    nsteps = pl.cdiv(B128, tb)
    return tb, tb * nsteps, nsteps


@functools.partial(jax.jit, static_argnames=())
def commission_predictor(x, params):
    """x: (B, INPUT_DIM) float32.  params in PyTorch layout:
       w1 (64,4), b1 (64,), w2 (32,64), b2 (32,), w3 (1,32), b3 (1,)."""
    B = x.shape[0]
    TB, B_pad, nsteps = _choose_tiling(B)

    # Only a zero-pad of the batch if B isn't tile-aligned; no transpose, no cast.
    x_p = x.astype(jnp.float32)
    if B_pad != B:
        x_p = jnp.pad(x_p, ((0, B_pad - B), (0, 0)))

    w1 = params["w1"].astype(jnp.float32)                          # (64, 4)  f32 MXU operand
    b1 = params["b1"].reshape(H1, 1).astype(jnp.float32)           # (64, 1)
    w2 = params["w2"].astype(jnp.bfloat16)                         # (32, 64) bf16 MXU operand
    b2 = params["b2"].reshape(H2, 1).astype(jnp.float32)           # (32, 1)
    w3p = jnp.pad(params["w3"].astype(jnp.float32),
                  ((0, OUT_PAD - OUT), (0, 0)))                    # (8, 32)  zero-padded rows
    b3 = params["b3"].reshape(OUT, OUT).astype(jnp.float32)        # (1, 1)

    flops = 2 * B_pad * (INPUT_DIM * H1 + H1 * H2 + H2 * OUT_PAD)
    bytes_accessed = (
        B_pad * INPUT_DIM * 4 + B_pad * OUT * 4
        + w1.size * 4 + b1.size * 4 + w2.size * 2 + b2.size * 4
        + w3p.size * 4 + b3.size * 4
    )

    out_t = pl.pallas_call(
        _mlp_kernel,
        out_shape=jax.ShapeDtypeStruct((OUT, B_pad), jnp.float32),
        grid=(nsteps,),
        in_specs=[
            pl.BlockSpec((TB, INPUT_DIM), lambda i: (i, 0)),   # x tile: natural layout, walks batch
            pl.BlockSpec((H1, INPUT_DIM), lambda i: (0, 0)),   # tiny weights: constant maps (stay resident)
            pl.BlockSpec((H1, 1), lambda i: (0, 0)),
            pl.BlockSpec((H2, H1), lambda i: (0, 0)),
            pl.BlockSpec((H2, 1), lambda i: (0, 0)),
            pl.BlockSpec((OUT_PAD, H2), lambda i: (0, 0)),
            pl.BlockSpec((OUT, OUT), lambda i: (0, 0)),
        ],
        out_specs=pl.BlockSpec((OUT, TB), lambda i: (0, i)),
        compiler_params=pltpu.CompilerParams(
            dimension_semantics=("parallel",),        # batch tiles shard across TCs (v7x)
            vmem_limit_bytes=32 * 1024 * 1024,        # safe on v5e/v6e/v7x; usage ~14 MiB max
        ),
        cost_estimate=pl.CostEstimate(
            flops=flops, transcendentals=0, bytes_accessed=bytes_accessed
        ),
    )(x_p, w1, b1, w2, b2, w3p, b3)

    # (1, B_pad) -> (B, 1), dropping padded batch columns.
    return jnp.transpose(out_t[:, :B])


def init_params(key):
    """Deterministic init matching PyTorch nn.Linear (weights in (out, in) layout)."""
    def linear_init(k, fan_in, fan_out):
        kw, kb = jax.random.split(k)
        bound = 1.0 / jnp.sqrt(fan_in)
        w = jax.random.uniform(kw, (fan_out, fan_in), jnp.float32, -bound, bound)
        b = jax.random.uniform(kb, (fan_out,), jnp.float32, -bound, bound)
        return w, b

    k1, k2, k3 = jax.random.split(key, 3)
    w1, b1 = linear_init(k1, INPUT_DIM, H1)
    w2, b2 = linear_init(k2, H1, H2)
    w3, b3 = linear_init(k3, H2, OUT)
    return {"w1": w1, "b1": b1, "w2": w2, "b2": b2, "w3": w3, "b3": b3}


def _reference(x, p):
    # Pure-JAX f32 reference, PyTorch semantics: y = relu(x W1^T + b1) ... W3^T + b3
    h1 = jnp.maximum(x @ p["w1"].T + p["b1"], 0.0)
    h2 = jnp.maximum(h1 @ p["w2"].T + p["b2"], 0.0)
    return h2 @ p["w3"].T + p["b3"]


if __name__ == "__main__":
    key = jax.random.PRNGKey(0)
    kx, kp = jax.random.split(key)

    B = 8
    x = jax.random.normal(kx, (B, INPUT_DIM), jnp.float32)
    params = init_params(kp)

    out = commission_predictor(x, params)
    jax.block_until_ready(out)

    ref = _reference(x, params)
    assert out.shape == (B, OUT)
    # Only the layer-2 MXU operands are bf16 (f32 accumulation) -> small error.
    assert jnp.allclose(out, ref, atol=2e-2, rtol=2e-2), (out, ref)

    print("KERNEL_OK")
</pallas_src>

<mosaic_0001>
module attributes {stable_mosaic.version = 11 : i64} {
  func.func @_mlp_kernel(%arg0: i32, %arg1: memref<128x4xf32, #tpu.memory_space<vmem>>, %arg2: memref<64x4xf32, #tpu.memory_space<vmem>>, %arg3: memref<64x1xf32, #tpu.memory_space<vmem>>, %arg4: memref<32x64xbf16, #tpu.memory_space<vmem>>, %arg5: memref<32x1xf32, #tpu.memory_space<vmem>>, %arg6: memref<8x32xf32, #tpu.memory_space<vmem>>, %arg7: memref<1x1xf32, #tpu.memory_space<vmem>>, %arg8: memref<1x128xf32, #tpu.memory_space<vmem>>) attributes {dimension_semantics = [#tpu.dimension_semantics<parallel>], iteration_bounds = array<i64: 1>, scalar_prefetch = 0 : i64, scratch_operands = 0 : i64, tpu.core_type = #tpu.core_type<tc>, window_params = [{transform_indices = @transform_0, window_bounds = array<i64: 128, 4>}, {pipeline_mode = #tpu.pipeline_mode<synchronous>, transform_indices = @transform_1, window_bounds = array<i64: 64, 4>}, {pipeline_mode = #tpu.pipeline_mode<synchronous>, transform_indices = @transform_2, window_bounds = array<i64: 64, 1>}, {pipeline_mode = #tpu.pipeline_mode<synchronous>, transform_indices = @transform_3, window_bounds = array<i64: 32, 64>}, {pipeline_mode = #tpu.pipeline_mode<synchronous>, transform_indices = @transform_4, window_bounds = array<i64: 32, 1>}, {pipeline_mode = #tpu.pipeline_mode<synchronous>, transform_indices = @transform_5, window_bounds = array<i64: 8, 32>}, {pipeline_mode = #tpu.pipeline_mode<synchronous>, transform_indices = @transform_6, window_bounds = array<i64: 1, 1>}, {transform_indices = @transform_7, window_bounds = array<i64: 1, 128>}]} {
    %c0 = arith.constant 0 : index
    %c0_0 = arith.constant 0 : index
    %0 = vector.load %arg1[%c0, %c0_0] : memref<128x4xf32, #tpu.memory_space<vmem>>, vector<128x4xf32>
    %c0_1 = arith.constant 0 : index
    %c0_2 = arith.constant 0 : index
    %1 = vector.load %arg2[%c0_1, %c0_2] : memref<64x4xf32, #tpu.memory_space<vmem>>, vector<64x4xf32>
    %cst = arith.constant dense<0.000000e+00> : vector<64x128xf32>
    %2 = tpu.matmul %1, %0, %cst {dimension_numbers = #tpu.dot_dimension_numbers<[1], [1], [0], [0], [0, 0, 1, 0], [], []>} : vector<64x4xf32>, vector<128x4xf32>, vector<64x128xf32> -> vector<64x128xf32>
    %c0_3 = arith.constant 0 : index
    %c0_4 = arith.constant 0 : index
    %3 = vector.load %arg3[%c0_3, %c0_4] : memref<64x1xf32, #tpu.memory_space<vmem>>, vector<64x1xf32>
    %4 = vector.broadcast %3 : vector<64x1xf32> to vector<64x128xf32>
    %5 = arith.addf %2, %4 : vector<64x128xf32>
    %cst_5 = arith.constant 0.000000e+00 : f32
    %6 = vector.broadcast %cst_5 : f32 to vector<64x128xf32>
    %7 = arith.maximumf %5, %6 : vector<64x128xf32>
    %c0_6 = arith.constant 0 : index
    %c0_7 = arith.constant 0 : index
    %8 = vector.load %arg4[%c0_6, %c0_7] : memref<32x64xbf16, #tpu.memory_space<vmem>>, vector<32x64xbf16>
    %9 = arith.truncf %7 : vector<64x128xf32> to vector<64x128xbf16>
    %cst_8 = arith.constant dense<0.000000e+00> : vector<32x128xf32>
    %10 = tpu.matmul %8, %9, %cst_8 {dimension_numbers = #tpu.dot_dimension_numbers<[1], [0], [0], [1], [0, 0, 1, 1], [], []>} : vector<32x64xbf16>, vector<64x128xbf16>, vector<32x128xf32> -> vector<32x128xf32>
    %c0_9 = arith.constant 0 : index
    %c0_10 = arith.constant 0 : index
    %11 = vector.load %arg5[%c0_9, %c0_10] : memref<32x1xf32, #tpu.memory_space<vmem>>, vector<32x1xf32>
    %12 = vector.broadcast %11 : vector<32x1xf32> to vector<32x128xf32>
    %13 = arith.addf %10, %12 : vector<32x128xf32>
    %cst_11 = arith.constant 0.000000e+00 : f32
    %14 = vector.broadcast %cst_11 : f32 to vector<32x128xf32>
    %15 = arith.maximumf %13, %14 : vector<32x128xf32>
    %c0_12 = arith.constant 0 : index
    %c0_13 = arith.constant 0 : index
    %16 = vector.load %arg6[%c0_12, %c0_13] : memref<8x32xf32, #tpu.memory_space<vmem>>, vector<8x32xf32>
    %cst_14 = arith.constant dense<0.000000e+00> : vector<8x128xf32>
    %17 = tpu.matmul %16, %15, %cst_14 {dimension_numbers = #tpu.dot_dimension_numbers<[1], [0], [0], [1], [0, 0, 1, 1], [], []>} : vector<8x32xf32>, vector<32x128xf32>, vector<8x128xf32> -> vector<8x128xf32>
    %18 = vector.extract_strided_slice %17 {offsets = [0, 0], sizes = [1, 128], strides = [1, 1]} : vector<8x128xf32> to vector<1x128xf32>
    %c0_15 = arith.constant 0 : index
    %c0_16 = arith.constant 0 : index
    %19 = vector.load %arg7[%c0_15, %c0_16] : memref<1x1xf32, #tpu.memory_space<vmem>>, vector<1x1xf32>
    %20 = vector.broadcast %19 : vector<1x1xf32> to vector<1x128xf32>
    %21 = arith.addf %18, %20 : vector<1x128xf32>
    %c0_17 = arith.constant 0 : index
    %c0_18 = arith.constant 0 : index
    %22 = vector.load %arg8[%c0_17, %c0_18] : memref<1x128xf32, #tpu.memory_space<vmem>>, vector<1x128xf32>
    tpu.vector_store %arg8[%c0_17, %c0_18], %21 {strides = array<i32>} : memref<1x128xf32, #tpu.memory_space<vmem>>, vector<1x128xf32>,
    return
  }
  func.func @transform_0(%arg0: i32) -> (i32, i32) {
    %c0_i32 = arith.constant 0 : i32
    %c0_i32_0 = arith.constant 0 : i32
    return %arg0, %c0_i32 : i32, i32
  }
  func.func @transform_1(%arg0: i32) -> (i32, i32) {
    %c0_i32 = arith.constant 0 : i32
    %c0_i32_0 = arith.constant 0 : i32
    %c0_i32_1 = arith.constant 0 : i32
    return %c0_i32, %c0_i32_0 : i32, i32
  }
  func.func @transform_2(%arg0: i32) -> (i32, i32) {
    %c0_i32 = arith.constant 0 : i32
    %c0_i32_0 = arith.constant 0 : i32
    %c0_i32_1 = arith.constant 0 : i32
    return %c0_i32, %c0_i32_0 : i32, i32
  }
  func.func @transform_3(%arg0: i32) -> (i32, i32) {
    %c0_i32 = arith.constant 0 : i32
    %c0_i32_0 = arith.constant 0 : i32
    %c0_i32_1 = arith.constant 0 : i32
    return %c0_i32, %c0_i32_0 : i32, i32
  }
  func.func @transform_4(%arg0: i32) -> (i32, i32) {
    %c0_i32 = arith.constant 0 : i32
    %c0_i32_0 = arith.constant 0 : i32
    %c0_i32_1 = arith.constant 0 : i32
    return %c0_i32, %c0_i32_0 : i32, i32
  }
  func.func @transform_5(%arg0: i32) -> (i32, i32) {
    %c0_i32 = arith.constant 0 : i32
    %c0_i32_0 = arith.constant 0 : i32
    %c0_i32_1 = arith.constant 0 : i32
    return %c0_i32, %c0_i32_0 : i32, i32
  }
  func.func @transform_6(%arg0: i32) -> (i32, i32) {
    %c0_i32 = arith.constant 0 : i32
    %c0_i32_0 = arith.constant 0 : i32
    %c0_i32_1 = arith.constant 0 : i32
    return %c0_i32, %c0_i32_0 : i32, i32
  }
  func.func @transform_7(%arg0: i32) -> (i32, i32) {
    %c0_i32 = arith.constant 0 : i32
    %c0_i32_0 = arith.constant 0 : i32
    return %c0_i32, %arg0 : i32, i32
  }
}

</mosaic_0001>

<llo_original>
// kernel: commission_predictor.1
$region0: #{commission_predictor.1}
  #allocation0 [shape = 'u32[]', space=smem, size = 0x4, offset = 0x4, fixed_abs, tag = 'smem constant byte address 0x4 - core index']
  #allocation1 [shape = 'u32[72,128]{1,0:T(1,128)}', space=vmem, size = 0x9000, scoped, tag = 'internal scratch']
  #allocation2 [shape = 'f32[1,1]{1,0:T(1,128)S(1)}', space=vmem, size = 0x200, scoped, tag = 'scoped memory for commission_predictor.1']
  %s0 = inlined_call_operand.vmem [shape: f32[128,4], index: 0, kind: input, shape index: {}]
  %s1 = inlined_call_operand.vmem [shape: f32[64,4], index: 1, kind: input, shape index: {}]
  %s2 = inlined_call_operand.vmem [shape: f32[64,1], index: 2, kind: input, shape index: {}]
  %s3 = inlined_call_operand.vmem [shape: bf16[32,64], index: 3, kind: input, shape index: {}]
  %s4 = inlined_call_operand.vmem [shape: f32[32,1], index: 4, kind: input, shape index: {}]
  %s5 = inlined_call_operand.vmem [shape: f32[8,32], index: 5, kind: input, shape index: {}]
  %s6 = inlined_call_operand.<no memory space> [shape: f32[1,1], index: 6, kind: input, shape index: {}]
  %s7 = inlined_call_operand.vmem [shape: f32[1,128], index: 7, kind: output, shape index: {}]
  %s8 = sld [smem:[#allocation0]]
  $region38: #{commission_predictor.1} parent=0
    _
  %s10 = ssub.s32 1, %s8
  %s11 = scalar_select 0, %s10, %s8
  %v12 = vstv %s6
  %13 = vst [vmem:[#allocation2] sm:$0x1] %v12
  // Predicated region
  $region2: #{commission_predictor.1} parent=0 // pred_check
    _
  $region3: #{commission_predictor.1} parent=0 // pred_check_branch
    %15 = sbr.rel (0) target = $region5
  $region4: #{commission_predictor.1} parent=0 // pred_region
    _
  $region5: #{commission_predictor.1} parent=0 // pred_fallthru
    _
  // Predicated region
  $region6: #{commission_predictor.1} parent=0 // pred_check
    _
  $region7: #{commission_predictor.1} parent=0 // pred_check_branch
    %17 = sbr.rel (0) target = $region9
  $region8: #{commission_predictor.1} parent=0 // pred_region
    _
  $region9: #{commission_predictor.1} parent=0 // pred_fallthru
    _
  // Predicated region
  $region10: #{commission_predictor.1} parent=0 // pred_check
    _
  $region11: #{commission_predictor.1} parent=0 // pred_check_branch
    %19 = sbr.rel (0) target = $region13
  $region12: #{commission_predictor.1} parent=0 // pred_region
    _
  $region13: #{commission_predictor.1} parent=0 // pred_fallthru
    _
  // Predicated region
  $region14: #{commission_predictor.1} parent=0 // pred_check
    _
  $region15: #{commission_predictor.1} parent=0 // pred_check_branch
    %21 = sbr.rel (0) target = $region17
  $region16: #{commission_predictor.1} parent=0 // pred_region
    _
  $region17: #{commission_predictor.1} parent=0 // pred_fallthru
    _
  // Predicated region
  $region18: #{commission_predictor.1} parent=0 // pred_check
    _
  $region19: #{commission_predictor.1} parent=0 // pred_check_branch
    %23 = sbr.rel (0) target = $region21
  $region20: #{commission_predictor.1} parent=0 // pred_region
    _
  $region21: #{commission_predictor.1} parent=0 // pred_fallthru
    _
  // Predicated region
  $region22: #{commission_predictor.1} parent=0 // pred_check
    _
  $region23: #{commission_predictor.1} parent=0 // pred_check_branch
    %25 = sbr.rel (0) target = $region25
  $region24: #{commission_predictor.1} parent=0 // pred_region
    _
  $region25: #{commission_predictor.1} parent=0 // pred_fallthru
    _
  // Predicated region
  $region26: #{commission_predictor.1} parent=0 // pred_check
    _
  $region27: #{commission_predictor.1} parent=0 // pred_check_branch
    %27 = sbr.rel (0) target = $region29
  $region28: #{commission_predictor.1} parent=0 // pred_region
    _
  $region29: #{commission_predictor.1} parent=0 // pred_fallthru
    _
  %v29 = vld [vmem:[%s0] sm:$0xff]
  %v30 = vld [vmem:[%s0 + $0x8] sm:$0xff]
  %v31 = vld [vmem:[%s0 + $0x10] sm:$0xff]
  %v32 = vld [vmem:[%s0 + $0x18] sm:$0xff]
  %v33 = vld [vmem:[%s0 + $0x20] sm:$0xff]
  %v34 = vld [vmem:[%s0 + $0x28] sm:$0xff]
  %v35 = vld [vmem:[%s0 + $0x30] sm:$0xff]
  %v36 = vld [vmem:[%s0 + $0x38] sm:$0xff]
  %v37 = vld [vmem:[%s0 + $0x40] sm:$0xff]
  %v38 = vld [vmem:[%s0 + $0x48] sm:$0xff]
  %v39 = vld [vmem:[%s0 + $0x50] sm:$0xff]
  %v40 = vld [vmem:[%s0 + $0x58] sm:$0xff]
  %v41 = vld [vmem:[%s0 + $0x60] sm:$0xff]
  %v42 = vld [vmem:[%s0 + $0x68] sm:$0xff]
  %v43 = vld [vmem:[%s0 + $0x70] sm:$0xff]
  %v44 = vld [vmem:[%s0 + $0x78] sm:$0xff]
  %v45 = vld [vmem:[%s1] sm:$0xff]
  %v46 = vld [vmem:[%s1 + $0x8] sm:$0xff]
  %v47 = vld [vmem:[%s1 + $0x10] sm:$0xff]
  %v48 = vld [vmem:[%s1 + $0x18] sm:$0xff]
  %v49 = vld [vmem:[%s1 + $0x20] sm:$0xff]
  %v50 = vld [vmem:[%s1 + $0x28] sm:$0xff]
  %v51 = vld [vmem:[%s1 + $0x30] sm:$0xff]
  %v52 = vld [vmem:[%s1 + $0x38] sm:$0xff]
  %v53 = vld [vmem:[%s2] sm:$0xff]
  %v54 = vld [vmem:[%s2 + $0x8] sm:$0xff]
  %v55 = vld [vmem:[%s2 + $0x10] sm:$0xff]
  %v56 = vld [vmem:[%s2 + $0x18] sm:$0xff]
  %v57 = vld [vmem:[%s2 + $0x20] sm:$0xff]
  %v58 = vld [vmem:[%s2 + $0x28] sm:$0xff]
  %v59 = vld [vmem:[%s2 + $0x30] sm:$0xff]
  %v60 = vld [vmem:[%s2 + $0x38] sm:$0xff]
  %62 = vset.pattern.permute.xlu0 0
  %63 = vperm.xlu0 %62, %v53
  %v64 = vpop.permute.xlu0 %63
  %67 = vset.pattern.permute.xlu0 0
  %68 = vperm.xlu0 %67, %v54
  %v69 = vpop.permute.xlu0 %68
  %72 = vset.pattern.permute.xlu0 0
  %73 = vperm.xlu0 %72, %v55
  %v74 = vpop.permute.xlu0 %73
  %77 = vset.pattern.permute.xlu0 0
  %78 = vperm.xlu0 %77, %v56
  %v79 = vpop.permute.xlu0 %78
  %82 = vset.pattern.permute.xlu0 0
  %83 = vperm.xlu0 %82, %v57
  %v84 = vpop.permute.xlu0 %83
  %87 = vset.pattern.permute.xlu0 0
  %88 = vperm.xlu0 %87, %v58
  %v89 = vpop.permute.xlu0 %88
  %92 = vset.pattern.permute.xlu0 0
  %93 = vperm.xlu0 %92, %v59
  %v94 = vpop.permute.xlu0 %93
  %97 = vset.pattern.permute.xlu0 0
  %98 = vperm.xlu0 %97, %v60
  %v99 = vpop.permute.xlu0 %98
  %vm101 = vcmask 31744
  %v103 = vsel %vm101, %v45, 0
  %v106 = vsel %vm101, %v46, 0
  %v109 = vsel %vm101, %v47, 0
  %v112 = vsel %vm101, %v48, 0
  %v115 = vsel %vm101, %v49, 0
  %v118 = vsel %vm101, %v50, 0
  %v121 = vsel %vm101, %v51, 0
  %v124 = vsel %vm101, %v52, 0
  %v127 = vsel %vm101, %v29, 0
  %v130 = vsel %vm101, %v30, 0
  %v133 = vsel %vm101, %v31, 0
  %v136 = vsel %vm101, %v32, 0
  %v139 = vsel %vm101, %v33, 0
  %v142 = vsel %vm101, %v34, 0
  %v145 = vsel %vm101, %v35, 0
  %v148 = vsel %vm101, %v36, 0
  %v151 = vsel %vm101, %v37, 0
  %v154 = vsel %vm101, %v38, 0
  %v157 = vsel %vm101, %v39, 0
  %v160 = vsel %vm101, %v40, 0
  %v163 = vsel %vm101, %v41, 0
  %v166 = vsel %vm101, %v42, 0
  %v169 = vsel %vm101, %v43, 0
  %v172 = vsel %vm101, %v44, 0
  %174 = vmatpush.xpose.msra.mxu0 %v172
  %175 = vmatpush.xpose.msra.mxu0 %v169
  %176 = vmatpush.xpose.msra.mxu0 %v166
  %177 = vmatpush.xpose.msra.mxu0 %v163
  %178 = vmatpush.xpose.msra.mxu0 %v160
  %179 = vmatpush.xpose.msra.mxu0 %v157
  %180 = vmatpush.xpose.msra.mxu0 %v154
  %181 = vmatpush.xpose.msra.mxu0 %v151
  %182 = vmatpush.xpose.msra.mxu0 %v148
  %183 = vmatpush.xpose.msra.mxu0 %v145
  %184 = vmatpush.xpose.msra.mxu0 %v142
  %185 = vmatpush.xpose.msra.mxu0 %v139
  %186 = vmatpush.xpose.msra.mxu0 %v136
  %187 = vmatpush.xpose.msra.mxu0 %v133
  %188 = vmatpush.xpose.msra.mxu0 %v130
  %189 = vmatpush.xpose.msra.mxu0 %v127
  %190 = vmatmul.f32.gmra.mxu0 %v103
  %v191 = vpop.f32.mrf.mxu0
  %v192 = vadd.f32 %v64, %v191
  %193 = vmatmul.f32.gmra.mxu0 %v106
  %v194 = vpop.f32.mrf.mxu0
  %v195 = vadd.f32 %v69, %v194
  %196 = vmatmul.f32.gmra.mxu0 %v109
  %v197 = vpop.f32.mrf.mxu0
  %v198 = vadd.f32 %v74, %v197
  %199 = vmatmul.f32.gmra.mxu0 %v112
  %v200 = vpop.f32.mrf.mxu0
  %v201 = vadd.f32 %v79, %v200
  %202 = vmatmul.f32.gmra.mxu0 %v115
  %v203 = vpop.f32.mrf.mxu0
  %v204 = vadd.f32 %v84, %v203
  %205 = vmatmul.f32.gmra.mxu0 %v118
  %v206 = vpop.f32.mrf.mxu0
  %v207 = vadd.f32 %v89, %v206
  %208 = vmatmul.f32.gmra.mxu0 %v121
  %v209 = vpop.f32.mrf.mxu0
  %v210 = vadd.f32 %v94, %v209
  %211 = vmatmul.f32.gmra.mxu0 %v124
  %v212 = vpop.f32.mrf.mxu0
  %v213 = vadd.f32 %v99, %v212
  %214 = vdwg.mxu0
  %v215 = vmax.f32 %v192, 0.0
  %v216 = vmax.f32 %v195, 0.0
  %v217 = vmax.f32 %v198, 0.0
  %v218 = vmax.f32 %v201, 0.0
  %v219 = vmax.f32 %v204, 0.0
  %v220 = vmax.f32 %v207, 0.0
  %v221 = vmax.f32 %v210, 0.0
  %v222 = vmax.f32 %v213, 0.0
  %v223 = vld [vmem:[%s3] sm:$0xf]
  %v224 = vld [vmem:[%s3 + $0x4] sm:$0xf]
  %v225 = vld [vmem:[%s3 + $0x8] sm:$0xf]
  %v226 = vld [vmem:[%s3 + $0xc] sm:$0xf]
  %v227 = vpack.c.bf16 %v216, %v215
  %v228 = vpack.c.bf16 %v218, %v217
  %v229 = vpack.c.bf16 %v220, %v219
  %v230 = vpack.c.bf16 %v222, %v221
  %v231 = vld [vmem:[%s4] sm:$0xff]
  %v232 = vld [vmem:[%s4 + $0x8] sm:$0xff]
  %v233 = vld [vmem:[%s4 + $0x10] sm:$0xff]
  %v234 = vld [vmem:[%s4 + $0x18] sm:$0xff]
  %236 = vset.pattern.permute.xlu0 0
  %237 = vperm.xlu0 %236, %v231
  %v238 = vpop.permute.xlu0 %237
  %241 = vset.pattern.permute.xlu0 0
  %242 = vperm.xlu0 %241, %v232
  %v243 = vpop.permute.xlu0 %242
  %246 = vset.pattern.permute.xlu0 0
  %247 = vperm.xlu0 %246, %v233
  %v248 = vpop.permute.xlu0 %247
  %251 = vset.pattern.permute.xlu0 0
  %252 = vperm.xlu0 %251, %v234
  %v253 = vpop.permute.xlu0 %252
  %v259 = vunpack.c.l.b16 %v223
  %v260 = vunpack.c.l.b16 %v224
  %v261 = vunpack.c.l.b16 %v225
  %v262 = vunpack.c.l.b16 %v226
  %v263 = vpack.c.b16 %v260, %v259
  %v264 = vpack.c.b16 %v262, %v261
  %vm265 = vcmask 523264
  %v267 = vsel %vm265, %v263, 0
  %v270 = vsel %vm265, %v264, 0
  %272 = vmatpush.bf16.msra.mxu0 0
  %273 = vmatpush.bf16.msra.mxu0 0
  %274 = vmatpush.bf16.msra.mxu0 0
  %275 = vmatpush.bf16.msra.mxu0 0
  %276 = vmatpush.bf16.msra.mxu0 %v230
  %277 = vmatpush.bf16.msra.mxu0 %v229
  %278 = vmatpush.bf16.msra.mxu0 %v228
  %279 = vmatpush.bf16.msra.mxu0 %v227
  %280 = vmatmul.bf16.gmra.mxu0 %v267
  %v281 = vpop.f32.mrf.mxu0
  %v282 = vadd.f32 %v238, %v281
  %v283 = vpop.f32.mrf.mxu0
  %v284 = vadd.f32 %v243, %v283
  %285 = vmatmul.bf16.gmra.mxu0 %v270
  %v286 = vpop.f32.mrf.mxu0
  %v287 = vadd.f32 %v248, %v286
  %v288 = vpop.f32.mrf.mxu0
  %v289 = vadd.f32 %v253, %v288
  %290 = vdwg.mxu0
  %v291 = vmax.f32 %v282, 0.0
  %v292 = vmax.f32 %v284, 0.0
  %v293 = vmax.f32 %v287, 0.0
  %v294 = vmax.f32 %v289, 0.0
  %v295 = vld [vmem:[%s5] sm:$0xff]
  %vm296 = vcmask 261120
  %v298 = vsel %vm296, %v295, 0
  %300 = vmatpush.msra.mxu0 0.0
  %301 = vmatpush.msra.mxu0 0.0
  %302 = vmatpush.msra.mxu0 0.0
  %303 = vmatpush.msra.mxu0 0.0
  %304 = vmatpush.msra.mxu0 0.0
  %305 = vmatpush.msra.mxu0 0.0
  %306 = vmatpush.msra.mxu0 0.0
  %307 = vmatpush.msra.mxu0 0.0
  %308 = vmatpush.msra.mxu0 0.0
  %309 = vmatpush.msra.mxu0 0.0
  %310 = vmatpush.msra.mxu0 0.0
  %311 = vmatpush.msra.mxu0 0.0
  %312 = vmatpush.msra.mxu0 %v294
  %313 = vmatpush.msra.mxu0 %v293
  %314 = vmatpush.msra.mxu0 %v292
  %315 = vmatpush.msra.mxu0 %v291
  %316 = vmatmul.f32.gmra.mxu0 %v298
  %v317 = vpop.f32.mrf.mxu0
  %v318 = vadd.f32 0.0, %v317
  %319 = vdwg.mxu0
  %v320 = vld [vmem:[#allocation2] sm:$0x1]
  %322 = vset.pattern.permute.xlu0 0
  %323 = vperm.xlu0 %322, %v320
  %v324 = vpop.permute.xlu0 %323
  %v326 = vperm.slane %v324, 0
  %v327 = vadd.f32 %v318, %v326
  %328 = vst [vmem:[%s7] sm:$0x1] %v327
  // Predicated region
  $region30: #{commission_predictor.1} parent=0 // pred_check
    _
  $region31: #{commission_predictor.1} parent=0 // pred_check_branch
    %330 = sbr.rel (0) target = $region33
  $region32: #{commission_predictor.1} parent=0 // pred_region
    _
  $region33: #{commission_predictor.1} parent=0 // pred_fallthru
    _
  // Predicated region
  $region34: #{commission_predictor.1} parent=0 // pred_check
    _
  $region35: #{commission_predictor.1} parent=0 // pred_check_branch
    %332 = sbr.rel (0) target = $region37
  $region36: #{commission_predictor.1} parent=0 // pred_region
    _
  $region37: #{commission_predictor.1} parent=0 // pred_fallthru
    _

</llo_original>
